<compile_context>
chip_gen: v7x
topology: tpu7x:2x2x1
jax: 0.10.0
libtpu: 0.0.40
codegen_flags: <defaults>
</compile_context>

<pallas_src>
import jax
import jax.numpy as jnp
from jax.experimental import pallas as pl
from jax.experimental.pallas import tpu as pltpu


def _round_up(x, m):
    return (x + m - 1) // m * m


def _spatial_branch_kernel(x_ref, w_ref, o_ref, acc_ref):
    # x_ref: (TM, TK)   w_ref: (TK, 1)   o_ref: (TM, 1)   acc_ref: (TM, 1) f32
    @pl.when(pl.program_id(1) == 0)
    def _():
        acc_ref[...] = jnp.zeros_like(acc_ref)

    acc_ref[...] += jnp.dot(
        x_ref[...], w_ref[...], preferred_element_type=jnp.float32
    )

    @pl.when(pl.program_id(1) == pl.num_programs(1) - 1)
    def _():
        o_ref[...] = acc_ref[...].astype(o_ref.dtype)


def spatial_branch(x, weight, *, tm=512, tk=2048):
    """x: (N, C, H, W) float32; weight: (1, H*W, 1) float32 (Conv1d weight, no bias)."""
    n, c, h, w = x.shape
    hw = h * w
    m = n * c

    x_mat = x.reshape(m, hw)          # row-major flatten == torch .view order
    w_mat = weight.reshape(hw, 1)     # (H*W, 1)

    # Tile sizes: clamp to (8,128)-padded extents, keep blocks (8,128)-aligned.
    m_pad = _round_up(m, 8)
    k_pad = _round_up(hw, 128)
    tm = min(tm, m_pad)
    tk = min(tk, k_pad)
    m_pad = _round_up(m_pad, tm)
    k_pad = _round_up(k_pad, tk)

    # Zero-padding is numerically exact for this weighted-sum reduction.
    if (m_pad, k_pad) != (m, hw):
        x_mat = jnp.pad(x_mat, ((0, m_pad - m), (0, k_pad - hw)))
    if k_pad != hw:
        w_mat = jnp.pad(w_mat, ((0, k_pad - hw), (0, 0)))

    grid = (m_pad // tm, k_pad // tk)

    out = pl.pallas_call(
        _spatial_branch_kernel,
        out_shape=jax.ShapeDtypeStruct((m_pad, 1), x.dtype),
        grid_spec=pltpu.PrefetchScalarGridSpec(
            num_scalar_prefetch=0,
            grid=grid,
            in_specs=[
                pl.BlockSpec((tm, tk), lambda i, k: (i, k)),
                pl.BlockSpec((tk, 1), lambda i, k: (k, 0)),
            ],
            out_specs=pl.BlockSpec((tm, 1), lambda i, k: (i, 0)),
            scratch_shapes=[pltpu.VMEM((tm, 1), jnp.float32)],
        ),
        compiler_params=pltpu.CompilerParams(
            # M axis parallel (megacore sharding on v7x), K reduction arbitrary+last.
            dimension_semantics=("parallel", "arbitrary"),
        ),
        cost_estimate=pl.CostEstimate(
            flops=2 * m_pad * k_pad,
            bytes_accessed=4 * (m_pad * k_pad + k_pad + m_pad),
            transcendentals=0,
        ),
    )(x_mat, w_mat)

    return out[:m].reshape(n, c, 1, 1)


def spatial_branch_ref(x, weight):
    """Pure-JAX reference mirroring the PyTorch forward."""
    n, c, h, w = x.shape
    xt = x.reshape(n, c, h * w).transpose(0, 2, 1)        # (N, H*W, C)
    # Conv1d k=1, no bias: out[n, 0, c] = sum_s weight[0, s, 0] * xt[n, s, c]
    y = jnp.einsum("nsc,s->nc", xt, weight[0, :, 0])
    return y.reshape(n, c, 1, 1)


def _make_inputs(key, n, c, h, w):
    kx, kw = jax.random.split(key)
    x = jax.random.normal(kx, (n, c, h, w), dtype=jnp.float32)
    fan_in = h * w
    bound = 1.0 / (fan_in ** 0.5)
    weight = jax.random.uniform(
        kw, (1, h * w, 1), dtype=jnp.float32, minval=-bound, maxval=bound
    )
    return x, weight


if __name__ == "__main__":
    key = jax.random.PRNGKey(0)
    k0, k1 = jax.random.split(key)

    # Primary shape: size=16 -> Conv1d(in=256, out=1, k=1); aligned case.
    N, C, H, W = 2, 4, 16, 16
    x, weight = _make_inputs(k0, N, C, H, W)
    out = spatial_branch(x, weight)
    jax.block_until_ready(out)
    ref = spatial_branch_ref(x, weight)
    assert out.shape == (N, C, 1, 1)
    assert jnp.allclose(out, ref, atol=1e-5, rtol=1e-5)

    # Non-aligned case (exercises the zero-padding path): 7x7 spatial, C=3.
    N2, C2, H2, W2 = 2, 3, 7, 7
    x2, weight2 = _make_inputs(k1, N2, C2, H2, W2)
    out2 = spatial_branch(x2, weight2)
    jax.block_until_ready(out2)
    ref2 = spatial_branch_ref(x2, weight2)
    assert out2.shape == (N2, C2, 1, 1)
    assert jnp.allclose(out2, ref2, atol=1e-5, rtol=1e-5)

    print("KERNEL_OK")
</pallas_src>

<mosaic_0001>
module attributes {stable_mosaic.version = 11 : i64} {
  func.func @_spatial_branch_kernel(%arg0: i32, %arg1: i32, %arg2: memref<8x256xf32, #tpu.memory_space<vmem>>, %arg3: memref<256x1xf32, #tpu.memory_space<vmem>>, %arg4: memref<8x1xf32, #tpu.memory_space<vmem>>, %arg5: memref<8x1xf32, #tpu.memory_space<vmem>>) attributes {dimension_semantics = [#tpu.dimension_semantics<parallel>, #tpu.dimension_semantics<arbitrary>], iteration_bounds = array<i64: 1, 1>, scalar_prefetch = 0 : i64, scratch_operands = 1 : i64, tpu.core_type = #tpu.core_type<tc>, window_params = [{transform_indices = @transform_0, window_bounds = array<i64: 8, 256>}, {transform_indices = @transform_1, window_bounds = array<i64: 256, 1>}, {transform_indices = @transform_2, window_bounds = array<i64: 8, 1>}]} {
    %c0_i32 = arith.constant 0 : i32
    %0 = arith.cmpi eq, %arg1, %c0_i32 : i32
    %1 = arith.extui %0 : i1 to i32
    %c0_i32_0 = arith.constant 0 : i32
    %2 = arith.cmpi ne, %1, %c0_i32_0 : i32
    scf.if %2 {
      %cst_10 = arith.constant 0.000000e+00 : f32
      %12 = vector.broadcast %cst_10 : f32 to vector<8x1xf32>
      %c0_11 = arith.constant 0 : index
      %c0_12 = arith.constant 0 : index
      %13 = vector.load %arg5[%c0_11, %c0_12] : memref<8x1xf32, #tpu.memory_space<vmem>>, vector<8x1xf32>
      tpu.vector_store %arg5[%c0_11, %c0_12], %12 {strides = array<i32>} : memref<8x1xf32, #tpu.memory_space<vmem>>, vector<8x1xf32>,
    } else {
    }
    %c0 = arith.constant 0 : index
    %c0_1 = arith.constant 0 : index
    %3 = vector.load %arg5[%c0, %c0_1] : memref<8x1xf32, #tpu.memory_space<vmem>>, vector<8x1xf32>
    %c0_2 = arith.constant 0 : index
    %c0_3 = arith.constant 0 : index
    %4 = vector.load %arg2[%c0_2, %c0_3] : memref<8x256xf32, #tpu.memory_space<vmem>>, vector<8x256xf32>
    %c0_4 = arith.constant 0 : index
    %c0_5 = arith.constant 0 : index
    %5 = vector.load %arg3[%c0_4, %c0_5] : memref<256x1xf32, #tpu.memory_space<vmem>>, vector<256x1xf32>
    %cst = arith.constant dense<0.000000e+00> : vector<8x1xf32>
    %6 = tpu.matmul %4, %5, %cst {dimension_numbers = #tpu.dot_dimension_numbers<[1], [0], [0], [1], [0, 0, 1, 1], [], []>} : vector<8x256xf32>, vector<256x1xf32>, vector<8x1xf32> -> vector<8x1xf32>
    %7 = arith.addf %3, %6 : vector<8x1xf32>
    %c0_6 = arith.constant 0 : index
    %c0_7 = arith.constant 0 : index
    %8 = vector.load %arg5[%c0_6, %c0_7] : memref<8x1xf32, #tpu.memory_space<vmem>>, vector<8x1xf32>
    tpu.vector_store %arg5[%c0_6, %c0_7], %7 {strides = array<i32>} : memref<8x1xf32, #tpu.memory_space<vmem>>, vector<8x1xf32>,
    %c0_i32_8 = arith.constant 0 : i32
    %9 = arith.cmpi eq, %arg1, %c0_i32_8 : i32
    %10 = arith.extui %9 : i1 to i32
    %c0_i32_9 = arith.constant 0 : i32
    %11 = arith.cmpi ne, %10, %c0_i32_9 : i32
    scf.if %11 {
      %c0_10 = arith.constant 0 : index
      %c0_11 = arith.constant 0 : index
      %12 = vector.load %arg5[%c0_10, %c0_11] : memref<8x1xf32, #tpu.memory_space<vmem>>, vector<8x1xf32>
      %c0_12 = arith.constant 0 : index
      %c0_13 = arith.constant 0 : index
      %13 = vector.load %arg4[%c0_12, %c0_13] : memref<8x1xf32, #tpu.memory_space<vmem>>, vector<8x1xf32>
      tpu.vector_store %arg4[%c0_12, %c0_13], %12 {strides = array<i32>} : memref<8x1xf32, #tpu.memory_space<vmem>>, vector<8x1xf32>,
    } else {
    }
    return
  }
  func.func @transform_0(%arg0: i32, %arg1: i32) -> (i32, i32) {
    %c0_i32 = arith.constant 0 : i32
    return %arg0, %arg1 : i32, i32
  }
  func.func @transform_1(%arg0: i32, %arg1: i32) -> (i32, i32) {
    %c0_i32 = arith.constant 0 : i32
    %c0_i32_0 = arith.constant 0 : i32
    return %arg1, %c0_i32 : i32, i32
  }
  func.func @transform_2(%arg0: i32, %arg1: i32) -> (i32, i32) {
    %c0_i32 = arith.constant 0 : i32
    %c0_i32_0 = arith.constant 0 : i32
    return %arg0, %c0_i32 : i32, i32
  }
}

</mosaic_0001>

<llo_original>
// kernel: tpu_custom_call.1
$region0: #{tpu_custom_call.1}
  #allocation0 [shape = 'u32[]', space=smem, size = 0x4, offset = 0x4, fixed_abs, tag = 'smem constant byte address 0x4 - core index']
  #allocation1 [shape = 'u32[144,128]{1,0:T(1,128)}', space=vmem, size = 0x12000, scoped, tag = 'internal scratch']
  #allocation2 [shape = 'f32[8,1]{1,0:T(8,128)}', space=vmem, size = 0x1000, scoped, tag = 'scratch operand']
  %s0 = inlined_call_operand.vmem [shape: f32[8,256], index: 0, kind: input, shape index: {}]
  %s1 = inlined_call_operand.vmem [shape: f32[256,1], index: 1, kind: input, shape index: {}]
  %s2 = inlined_call_operand.vmem [shape: f32[8,1], index: 2, kind: output, shape index: {}]
  %s3 = sld [smem:[#allocation0]]
  $region26: #{tpu_custom_call.1} parent=0
    _
  %s5 = ssub.s32 1, %s3
  %s6 = scalar_select 0, %s5, %s3
  // Predicated region
  $region2: #{tpu_custom_call.1} parent=0 // pred_check
    _
  $region3: #{tpu_custom_call.1} parent=0 // pred_check_branch
    %8 = sbr.rel (0) target = $region5
  $region4: #{tpu_custom_call.1} parent=0 // pred_region
    _
  $region5: #{tpu_custom_call.1} parent=0 // pred_fallthru
    _
  // Predicated region
  $region6: #{tpu_custom_call.1} parent=0 // pred_check
    _
  $region7: #{tpu_custom_call.1} parent=0 // pred_check_branch
    %10 = sbr.rel (0) target = $region9
  $region8: #{tpu_custom_call.1} parent=0 // pred_region
    _
  $region9: #{tpu_custom_call.1} parent=0 // pred_fallthru
    _
  %p11 = scmp.eq.s32.totalorder 0, 0
  // Predicated region
  $region10: #{tpu_custom_call.1} parent=0 // pred_check
    %p12 = pneg %p11
  $region11: #{tpu_custom_call.1} parent=0 // pred_check_branch
    %14 = sbr.rel (%p12) target = $region13
  $region12: #{tpu_custom_call.1} parent=0 // pred_region
    %vm15 = vcmask 7168
    %16 = vst.msk [vmem:[#allocation2] sm:$0xff] %vm15, 0.0
  $region13: #{tpu_custom_call.1} parent=0 // pred_fallthru
    _
  %v17 = vld [vmem:[#allocation2] sm:$0xff]
  %v18 = vld [vmem:[%s0] sm:$0xff]
  %v19 = vld [vmem:[%s0 + $0x8] sm:$0xff]
  %v20 = vld [vmem:[%s1] sm:$0xff]
  %v21 = vld [vmem:[%s1 + $0x8] sm:$0xff]
  %v22 = vld [vmem:[%s1 + $0x10] sm:$0xff]
  %v23 = vld [vmem:[%s1 + $0x18] sm:$0xff]
  %v24 = vld [vmem:[%s1 + $0x20] sm:$0xff]
  %v25 = vld [vmem:[%s1 + $0x28] sm:$0xff]
  %v26 = vld [vmem:[%s1 + $0x30] sm:$0xff]
  %v27 = vld [vmem:[%s1 + $0x38] sm:$0xff]
  %v28 = vld [vmem:[%s1 + $0x40] sm:$0xff]
  %v29 = vld [vmem:[%s1 + $0x48] sm:$0xff]
  %v30 = vld [vmem:[%s1 + $0x50] sm:$0xff]
  %v31 = vld [vmem:[%s1 + $0x58] sm:$0xff]
  %v32 = vld [vmem:[%s1 + $0x60] sm:$0xff]
  %v33 = vld [vmem:[%s1 + $0x68] sm:$0xff]
  %v34 = vld [vmem:[%s1 + $0x70] sm:$0xff]
  %v35 = vld [vmem:[%s1 + $0x78] sm:$0xff]
  %v36 = vld [vmem:[%s1 + $0x80] sm:$0xff]
  %v37 = vld [vmem:[%s1 + $0x88] sm:$0xff]
  %v38 = vld [vmem:[%s1 + $0x90] sm:$0xff]
  %v39 = vld [vmem:[%s1 + $0x98] sm:$0xff]
  %v40 = vld [vmem:[%s1 + $0xa0] sm:$0xff]
  %v41 = vld [vmem:[%s1 + $0xa8] sm:$0xff]
  %v42 = vld [vmem:[%s1 + $0xb0] sm:$0xff]
  %v43 = vld [vmem:[%s1 + $0xb8] sm:$0xff]
  %v44 = vld [vmem:[%s1 + $0xc0] sm:$0xff]
  %v45 = vld [vmem:[%s1 + $0xc8] sm:$0xff]
  %v46 = vld [vmem:[%s1 + $0xd0] sm:$0xff]
  %v47 = vld [vmem:[%s1 + $0xd8] sm:$0xff]
  %v48 = vld [vmem:[%s1 + $0xe0] sm:$0xff]
  %v49 = vld [vmem:[%s1 + $0xe8] sm:$0xff]
  %v50 = vld [vmem:[%s1 + $0xf0] sm:$0xff]
  %v51 = vld [vmem:[%s1 + $0xf8] sm:$0xff]
  %52 = vmatprep.subr.mxu0 0.0
  %53 = vmatpush1.msra.mxu0 %v20
  %54 = vmatprep.subr.mxu0 0.0
  %55 = vmatpush1.msra.mxu0 %v21
  %56 = vmatprep.subr.mxu0 0.0
  %57 = vmatpush1.msra.mxu0 %v22
  %58 = vmatprep.subr.mxu0 0.0
  %59 = vmatpush1.msra.mxu0 %v23
  %60 = vmatprep.subr.mxu0 0.0
  %61 = vmatpush1.msra.mxu0 %v24
  %62 = vmatprep.subr.mxu0 0.0
  %63 = vmatpush1.msra.mxu0 %v25
  %64 = vmatprep.subr.mxu0 0.0
  %65 = vmatpush1.msra.mxu0 %v26
  %66 = vmatprep.subr.mxu0 0.0
  %67 = vmatpush1.msra.mxu0 %v27
  %68 = vmatprep.subr.mxu0 0.0
  %69 = vmatpush1.msra.mxu0 %v28
  %70 = vmatprep.subr.mxu0 0.0
  %71 = vmatpush1.msra.mxu0 %v29
  %72 = vmatprep.subr.mxu0 0.0
  %73 = vmatpush1.msra.mxu0 %v30
  %74 = vmatprep.subr.mxu0 0.0
  %75 = vmatpush1.msra.mxu0 %v31
  %76 = vmatprep.subr.mxu0 0.0
  %77 = vmatpush1.msra.mxu0 %v32
  %78 = vmatprep.subr.mxu0 0.0
  %79 = vmatpush1.msra.mxu0 %v33
  %80 = vmatprep.subr.mxu0 0.0
  %81 = vmatpush1.msra.mxu0 %v34
  %82 = vmatprep.subr.mxu0 0.0
  %83 = vmatpush1.msra.mxu0 %v35
  %84 = vmatprep.subr.mxu0 0.0
  %85 = vmatpush1.msra.mxu0 %v36
  %86 = vmatprep.subr.mxu0 0.0
  %87 = vmatpush1.msra.mxu0 %v37
  %88 = vmatprep.subr.mxu0 0.0
  %89 = vmatpush1.msra.mxu0 %v38
  %90 = vmatprep.subr.mxu0 0.0
  %91 = vmatpush1.msra.mxu0 %v39
  %92 = vmatprep.subr.mxu0 0.0
  %93 = vmatpush1.msra.mxu0 %v40
  %94 = vmatprep.subr.mxu0 0.0
  %95 = vmatpush1.msra.mxu0 %v41
  %96 = vmatprep.subr.mxu0 0.0
  %97 = vmatpush1.msra.mxu0 %v42
  %98 = vmatprep.subr.mxu0 0.0
  %99 = vmatpush1.msra.mxu0 %v43
  %100 = vmatprep.subr.mxu0 0.0
  %101 = vmatpush1.msra.mxu0 %v44
  %102 = vmatprep.subr.mxu0 0.0
  %103 = vmatpush1.msra.mxu0 %v45
  %104 = vmatprep.subr.mxu0 0.0
  %105 = vmatpush1.msra.mxu0 %v46
  %106 = vmatprep.subr.mxu0 0.0
  %107 = vmatpush1.msra.mxu0 %v47
  %108 = vmatprep.subr.mxu0 0.0
  %109 = vmatpush1.msra.mxu0 %v48
  %110 = vmatprep.subr.mxu0 0.0
  %111 = vmatpush1.msra.mxu0 %v49
  %112 = vmatprep.subr.mxu0 0.0
  %113 = vmatpush1.msra.mxu0 %v50
  %114 = vmatprep.subr.mxu0 0.0
  %115 = vmatpush1.msra.mxu0 %v51
  %116 = vmatprep.mubr.f32.mxu0 %v19
  %117 = vmatmul.mubr.f32.gmra.mrb[0].mxu0 %v18
  %v118 = vpop.f32.mrb[0].mxu0
  %v119 = vadd.f32 0.0, %v118
  %v120 = vpop.f32.mrb[0].mxu0
  %121 = vdwg.mxu0
  %v122 = vadd.f32 %v17, %v119
  %vm123 = vcmask 7168
  %124 = vst.msk [vmem:[#allocation2] sm:$0xff] %vm123, %v122
  // Predicated region
  $region14: #{tpu_custom_call.1} parent=0 // pred_check
    %p125 = pneg %p11
  $region15: #{tpu_custom_call.1} parent=0 // pred_check_branch
    %127 = sbr.rel (%p125) target = $region17
  $region16: #{tpu_custom_call.1} parent=0 // pred_region
    %v128 = vld [vmem:[#allocation2] sm:$0xff]
    %129 = vst.msk [vmem:[%s2] sm:$0xff] %vm123, %v128
  $region17: #{tpu_custom_call.1} parent=0 // pred_fallthru
    _
  // Predicated region
  $region18: #{tpu_custom_call.1} parent=0 // pred_check
    _
  $region19: #{tpu_custom_call.1} parent=0 // pred_check_branch
    %131 = sbr.rel (0) target = $region21
  $region20: #{tpu_custom_call.1} parent=0 // pred_region
    _
  $region21: #{tpu_custom_call.1} parent=0 // pred_fallthru
    _
  // Predicated region
  $region22: #{tpu_custom_call.1} parent=0 // pred_check
    _
  $region23: #{tpu_custom_call.1} parent=0 // pred_check_branch
    %133 = sbr.rel (0) target = $region25
  $region24: #{tpu_custom_call.1} parent=0 // pred_region
    _
  $region25: #{tpu_custom_call.1} parent=0 // pred_fallthru
    _

</llo_original>
